<compile_context>
chip_gen: v7x
topology: tpu7x:2x2x1
jax: 0.10.0
libtpu: 0.0.40
codegen_flags: <defaults>
</compile_context>

<pallas_src>
import jax
import jax.numpy as jnp
from jax import lax
from jax.experimental import pallas as pl
from jax.experimental.pallas import tpu as pltpu

N = 8           # gene length / number of cities
D = 2           # coordinate dimension of the Euclidean distance_metric
P_TOTAL = 1024  # population size (chromosomes per call)


def mutate_kernel(cities_ref, swap_ref, gene_ref, gene_out_ref, fit_out_ref):
    # cities_ref : (N*D,) f32  in SMEM (flat coordinate table, scalar reads)
    # swap_ref   : (2, PB) i32 in VMEM (per-chromosome swap positions)
    # gene_ref   : (N, PB) i32 in VMEM (one chromosome per lane)
    g = gene_ref[...]                                    # (N, PB) int32, in [0, N)
    a = swap_ref[0:1, :]                                 # (1, PB)
    b = swap_ref[1:2, :]                                 # (1, PB)

    row = lax.broadcasted_iota(jnp.int32, g.shape, 0)    # (N, PB) sublane index
    mask_a = row == a                                    # one-hot per lane
    mask_b = row == b

    # Fused per-lane gather of gene[a] and gene[b] with a single sublane
    # reduction: gene values are < 8, so pack g[b] into bits 3..5.
    packed = jnp.where(mask_a, g, 0) | (jnp.where(mask_b, g, 0) << 3)
    combined = jnp.sum(packed, axis=0, keepdims=True)    # (1, PB)
    val_a = combined & 7                                 # gene[a]
    val_b = combined >> 3                                # gene[b]

    mutated = jnp.where(mask_a, val_b, jnp.where(mask_b, val_a, g))
    gene_out_ref[...] = mutated

    # ---- fitness: closed-tour Euclidean length ------------------------------
    # Gather city coordinates with N unrolled VPU selects against scalar SMEM
    # reads (no MXU one-hot matmul, no cross-lane reduce over D).
    ox = jnp.zeros(g.shape, jnp.float32)
    oy = jnp.zeros(g.shape, jnp.float32)
    for k in range(N):
        sel = mutated == k
        ox = jnp.where(sel, cities_ref[2 * k], ox)
        oy = jnp.where(sel, cities_ref[2 * k + 1], oy)

    # Next city along the (closed) tour: XLU sublane rotate. Total cycle
    # length is invariant to roll direction, so shift=+1 is fine.
    nx = pltpu.roll(ox, shift=1, axis=0)
    ny = pltpu.roll(oy, shift=1, axis=0)
    dx = ox - nx
    dy = oy - ny
    seg = jnp.sqrt(dx * dx + dy * dy)                        # (N, PB)
    fit_out_ref[...] = jnp.sum(seg, axis=0, keepdims=True)   # (1, PB)


def _num_grid_steps():
    # v7x has 2 TensorCores per chip -> exactly one "parallel" grid step per
    # core. v5e/v6e are single-TC -> one step total (kernel is step-overhead
    # bound, extra steps only add fixed cost).
    try:
        kind = jax.devices()[0].device_kind.lower()
    except Exception:
        return 1
    return 2 if "v7" in kind else 1


def mutate(gene_t, cities, swap_t):
    """Batched Mutate forward in the lane-major GA layout.

    gene_t  : (N, P) int32 — population of permutations, one chromosome/lane
    cities  : (N, D) f32   — parameters of the Euclidean distance_metric
    swap_t  : (2, P) int32 — per-chromosome swap positions in [0, N)
    returns : (mutated genes (N, P) int32, fitness (P,) f32)
    """
    n, P = gene_t.shape
    steps = _num_grid_steps()
    if P % (128 * steps) != 0:
        steps = 1
    pb = P // steps

    cities_flat = cities.astype(jnp.float32).reshape(-1)     # (N*D,) 1-D SMEM

    mut_t, fit = pl.pallas_call(
        mutate_kernel,
        out_shape=(jax.ShapeDtypeStruct((n, P), jnp.int32),
                   jax.ShapeDtypeStruct((1, P), jnp.float32)),
        grid=(steps,),
        in_specs=[
            pl.BlockSpec(memory_space=pltpu.MemorySpace.SMEM),   # cities (flat)
            pl.BlockSpec((2, pb), lambda i: (0, i)),             # swap idx
            pl.BlockSpec((n, pb), lambda i: (0, i)),             # genes
        ],
        out_specs=(
            pl.BlockSpec((n, pb), lambda i: (0, i)),             # mutated genes
            pl.BlockSpec((1, pb), lambda i: (0, i)),             # fitness
        ),
        # Mutated population overwrites the input gene buffer (in place when
        # the surrounding GA loop donates it under jit).
        input_output_aliases={2: 0},
        compiler_params=pltpu.CompilerParams(
            dimension_semantics=("parallel",)),
    )(cities_flat, swap_t.astype(jnp.int32), gene_t.astype(jnp.int32))
    return mut_t, fit.reshape(P)


def _reference(gene, cities, swap_idx):
    # gene: (P, N), swap_idx: (P, 2)
    P = gene.shape[0]
    rows = jnp.arange(P)
    a = swap_idx[:, 0]
    b = swap_idx[:, 1]
    va = gene[rows, a]
    vb = gene[rows, b]
    mut = gene.at[rows, a].set(vb).at[rows, b].set(va)
    ordered = cities[mut]                        # (P, N, D)
    nxt = jnp.roll(ordered, -1, axis=1)
    fit = jnp.sum(jnp.sqrt(jnp.sum((ordered - nxt) ** 2, axis=-1)), axis=-1)
    return mut, fit


if __name__ == "__main__":
    key = jax.random.PRNGKey(0)
    k_cities, k_perm, k_swap = jax.random.split(key, 3)

    # deterministic "parameters" of the distance_metric: city coordinates
    cities = jax.random.normal(k_cities, (N, D), dtype=jnp.float32)
    # deterministic population of permutation chromosomes (logical (P, N))
    perm_keys = jax.random.split(k_perm, P_TOTAL)
    gene = jax.vmap(lambda k: jax.random.permutation(k, N))(perm_keys).astype(jnp.int32)
    # deterministic per-chromosome swap positions
    swap_idx = jax.random.randint(k_swap, (P_TOTAL, 2), 0, N, dtype=jnp.int32)

    # Reference computed up-front from the logical-layout copies.
    ref_gene, ref_fit = _reference(gene, cities, swap_idx)

    # Lane-major GA layout (kept across GA iterations; built once here).
    gene_t = jnp.asarray(gene.T, dtype=jnp.int32)      # (N, P)
    swap_t = jnp.asarray(swap_idx.T, dtype=jnp.int32)  # (2, P)

    mut_t, fitness = mutate(gene_t, cities, swap_t)
    jax.block_until_ready((mut_t, fitness))

    assert (mut_t.T == ref_gene).all()
    assert jnp.allclose(fitness, ref_fit, rtol=1e-5, atol=1e-5)

    print("KERNEL_OK")
</pallas_src>

<mosaic_0001>
module attributes {stable_mosaic.version = 11 : i64} {
  func.func @mutate_kernel(%arg0: i32, %arg1: memref<16xf32, #tpu.memory_space<smem>>, %arg2: memref<2x1024xi32, #tpu.memory_space<vmem>>, %arg3: memref<8x1024xi32, #tpu.memory_space<vmem>>, %arg4: memref<8x1024xi32, #tpu.memory_space<vmem>>, %arg5: memref<1x1024xf32, #tpu.memory_space<vmem>>) attributes {dimension_semantics = [#tpu.dimension_semantics<parallel>], iteration_bounds = array<i64: 1>, scalar_prefetch = 0 : i64, scratch_operands = 0 : i64, tpu.core_type = #tpu.core_type<tc>, window_params = [{transform_indices = @transform_0, window_bounds = array<i64: 16>}, {transform_indices = @transform_1, window_bounds = array<i64: 2, 1024>}, {transform_indices = @transform_2, window_bounds = array<i64: 8, 1024>}, {transform_indices = @transform_3, window_bounds = array<i64: 8, 1024>}, {transform_indices = @transform_4, window_bounds = array<i64: 1, 1024>}]} {
    %c0 = arith.constant 0 : index
    %c0_0 = arith.constant 0 : index
    %0 = vector.load %arg3[%c0, %c0_0] : memref<8x1024xi32, #tpu.memory_space<vmem>>, vector<8x1024xi32>
    %c0_1 = arith.constant 0 : index
    %c0_2 = arith.constant 0 : index
    %1 = vector.load %arg2[%c0_1, %c0_2] : memref<2x1024xi32, #tpu.memory_space<vmem>>, vector<1x1024xi32>
    %c1 = arith.constant 1 : index
    %c0_3 = arith.constant 0 : index
    %2 = vector.load %arg2[%c1, %c0_3] : memref<2x1024xi32, #tpu.memory_space<vmem>>, vector<1x1024xi32>
    %3 = tpu.iota {dimensions = array<i32: 0>} : vector<8x1024xi32>
    %4 = vector.broadcast %1 : vector<1x1024xi32> to vector<8x1024xi32>
    %5 = arith.cmpi eq, %3, %4 : vector<8x1024xi32>
    %6 = vector.broadcast %2 : vector<1x1024xi32> to vector<8x1024xi32>
    %7 = arith.cmpi eq, %3, %6 : vector<8x1024xi32>
    %c0_i32 = arith.constant 0 : i32
    %8 = vector.broadcast %c0_i32 : i32 to vector<8x1024xi32>
    %9 = arith.select %5, %0, %8 : vector<8x1024xi1>, vector<8x1024xi32>
    %c0_i32_4 = arith.constant 0 : i32
    %10 = vector.broadcast %c0_i32_4 : i32 to vector<8x1024xi32>
    %11 = arith.select %7, %0, %10 : vector<8x1024xi1>, vector<8x1024xi32>
    %c3_i32 = arith.constant 3 : i32
    %12 = vector.broadcast %c3_i32 : i32 to vector<8x1024xi32>
    %13 = arith.shli %11, %12 : vector<8x1024xi32>
    %14 = arith.ori %9, %13 : vector<8x1024xi32>
    %cst = arith.constant dense<0> : vector<1024xi32>
    %15 = vector.multi_reduction <add>, %14, %cst [0] : vector<8x1024xi32> to vector<1024xi32>
    %16 = vector.shape_cast %15 : vector<1024xi32> to vector<1x1024xi32>
    %c7_i32 = arith.constant 7 : i32
    %17 = vector.broadcast %c7_i32 : i32 to vector<1x1024xi32>
    %18 = arith.andi %16, %17 : vector<1x1024xi32>
    %c3_i32_5 = arith.constant 3 : i32
    %19 = vector.broadcast %c3_i32_5 : i32 to vector<1x1024xi32>
    %20 = arith.shrsi %16, %19 : vector<1x1024xi32>
    %21 = vector.shape_cast %18 : vector<1x1024xi32> to vector<1x1024xi32>
    %22 = vector.broadcast %21 : vector<1x1024xi32> to vector<8x1024xi32>
    %23 = arith.select %7, %22, %0 : vector<8x1024xi1>, vector<8x1024xi32>
    %24 = vector.shape_cast %20 : vector<1x1024xi32> to vector<1x1024xi32>
    %25 = vector.broadcast %24 : vector<1x1024xi32> to vector<8x1024xi32>
    %26 = arith.select %5, %25, %23 : vector<8x1024xi1>, vector<8x1024xi32>
    %c0_6 = arith.constant 0 : index
    %c0_7 = arith.constant 0 : index
    %27 = vector.load %arg4[%c0_6, %c0_7] : memref<8x1024xi32, #tpu.memory_space<vmem>>, vector<8x1024xi32>
    tpu.vector_store %arg4[%c0_6, %c0_7], %26 {strides = array<i32>} : memref<8x1024xi32, #tpu.memory_space<vmem>>, vector<8x1024xi32>,
    %cst_8 = arith.constant 0.000000e+00 : f32
    %28 = vector.broadcast %cst_8 : f32 to vector<8x1024xf32>
    %cst_9 = arith.constant 0.000000e+00 : f32
    %29 = vector.broadcast %cst_9 : f32 to vector<8x1024xf32>
    %c0_i32_10 = arith.constant 0 : i32
    %30 = vector.broadcast %c0_i32_10 : i32 to vector<8x1024xi32>
    %31 = arith.cmpi eq, %26, %30 : vector<8x1024xi32>
    %c0_11 = arith.constant 0 : index
    %32 = memref.load %arg1[%c0_11] : memref<16xf32, #tpu.memory_space<smem>>
    %33 = vector.broadcast %32 : f32 to vector<8x1024xf32>
    %34 = arith.select %31, %33, %28 : vector<8x1024xi1>, vector<8x1024xf32>
    %c1_12 = arith.constant 1 : index
    %35 = memref.load %arg1[%c1_12] : memref<16xf32, #tpu.memory_space<smem>>
    %36 = vector.broadcast %35 : f32 to vector<8x1024xf32>
    %37 = arith.select %31, %36, %29 : vector<8x1024xi1>, vector<8x1024xf32>
    %c1_i32 = arith.constant 1 : i32
    %38 = vector.broadcast %c1_i32 : i32 to vector<8x1024xi32>
    %39 = arith.cmpi eq, %26, %38 : vector<8x1024xi32>
    %c2 = arith.constant 2 : index
    %40 = memref.load %arg1[%c2] : memref<16xf32, #tpu.memory_space<smem>>
    %41 = vector.broadcast %40 : f32 to vector<8x1024xf32>
    %42 = arith.select %39, %41, %34 : vector<8x1024xi1>, vector<8x1024xf32>
    %c3 = arith.constant 3 : index
    %43 = memref.load %arg1[%c3] : memref<16xf32, #tpu.memory_space<smem>>
    %44 = vector.broadcast %43 : f32 to vector<8x1024xf32>
    %45 = arith.select %39, %44, %37 : vector<8x1024xi1>, vector<8x1024xf32>
    %c2_i32 = arith.constant 2 : i32
    %46 = vector.broadcast %c2_i32 : i32 to vector<8x1024xi32>
    %47 = arith.cmpi eq, %26, %46 : vector<8x1024xi32>
    %c4 = arith.constant 4 : index
    %48 = memref.load %arg1[%c4] : memref<16xf32, #tpu.memory_space<smem>>
    %49 = vector.broadcast %48 : f32 to vector<8x1024xf32>
    %50 = arith.select %47, %49, %42 : vector<8x1024xi1>, vector<8x1024xf32>
    %c5 = arith.constant 5 : index
    %51 = memref.load %arg1[%c5] : memref<16xf32, #tpu.memory_space<smem>>
    %52 = vector.broadcast %51 : f32 to vector<8x1024xf32>
    %53 = arith.select %47, %52, %45 : vector<8x1024xi1>, vector<8x1024xf32>
    %c3_i32_13 = arith.constant 3 : i32
    %54 = vector.broadcast %c3_i32_13 : i32 to vector<8x1024xi32>
    %55 = arith.cmpi eq, %26, %54 : vector<8x1024xi32>
    %c6 = arith.constant 6 : index
    %56 = memref.load %arg1[%c6] : memref<16xf32, #tpu.memory_space<smem>>
    %57 = vector.broadcast %56 : f32 to vector<8x1024xf32>
    %58 = arith.select %55, %57, %50 : vector<8x1024xi1>, vector<8x1024xf32>
    %c7 = arith.constant 7 : index
    %59 = memref.load %arg1[%c7] : memref<16xf32, #tpu.memory_space<smem>>
    %60 = vector.broadcast %59 : f32 to vector<8x1024xf32>
    %61 = arith.select %55, %60, %53 : vector<8x1024xi1>, vector<8x1024xf32>
    %c4_i32 = arith.constant 4 : i32
    %62 = vector.broadcast %c4_i32 : i32 to vector<8x1024xi32>
    %63 = arith.cmpi eq, %26, %62 : vector<8x1024xi32>
    %c8 = arith.constant 8 : index
    %64 = memref.load %arg1[%c8] : memref<16xf32, #tpu.memory_space<smem>>
    %65 = vector.broadcast %64 : f32 to vector<8x1024xf32>
    %66 = arith.select %63, %65, %58 : vector<8x1024xi1>, vector<8x1024xf32>
    %c9 = arith.constant 9 : index
    %67 = memref.load %arg1[%c9] : memref<16xf32, #tpu.memory_space<smem>>
    %68 = vector.broadcast %67 : f32 to vector<8x1024xf32>
    %69 = arith.select %63, %68, %61 : vector<8x1024xi1>, vector<8x1024xf32>
    %c5_i32 = arith.constant 5 : i32
    %70 = vector.broadcast %c5_i32 : i32 to vector<8x1024xi32>
    %71 = arith.cmpi eq, %26, %70 : vector<8x1024xi32>
    %c10 = arith.constant 10 : index
    %72 = memref.load %arg1[%c10] : memref<16xf32, #tpu.memory_space<smem>>
    %73 = vector.broadcast %72 : f32 to vector<8x1024xf32>
    %74 = arith.select %71, %73, %66 : vector<8x1024xi1>, vector<8x1024xf32>
    %c11 = arith.constant 11 : index
    %75 = memref.load %arg1[%c11] : memref<16xf32, #tpu.memory_space<smem>>
    %76 = vector.broadcast %75 : f32 to vector<8x1024xf32>
    %77 = arith.select %71, %76, %69 : vector<8x1024xi1>, vector<8x1024xf32>
    %c6_i32 = arith.constant 6 : i32
    %78 = vector.broadcast %c6_i32 : i32 to vector<8x1024xi32>
    %79 = arith.cmpi eq, %26, %78 : vector<8x1024xi32>
    %c12 = arith.constant 12 : index
    %80 = memref.load %arg1[%c12] : memref<16xf32, #tpu.memory_space<smem>>
    %81 = vector.broadcast %80 : f32 to vector<8x1024xf32>
    %82 = arith.select %79, %81, %74 : vector<8x1024xi1>, vector<8x1024xf32>
    %c13 = arith.constant 13 : index
    %83 = memref.load %arg1[%c13] : memref<16xf32, #tpu.memory_space<smem>>
    %84 = vector.broadcast %83 : f32 to vector<8x1024xf32>
    %85 = arith.select %79, %84, %77 : vector<8x1024xi1>, vector<8x1024xf32>
    %c7_i32_14 = arith.constant 7 : i32
    %86 = vector.broadcast %c7_i32_14 : i32 to vector<8x1024xi32>
    %87 = arith.cmpi eq, %26, %86 : vector<8x1024xi32>
    %c14 = arith.constant 14 : index
    %88 = memref.load %arg1[%c14] : memref<16xf32, #tpu.memory_space<smem>>
    %89 = vector.broadcast %88 : f32 to vector<8x1024xf32>
    %90 = arith.select %87, %89, %82 : vector<8x1024xi1>, vector<8x1024xf32>
    %c15 = arith.constant 15 : index
    %91 = memref.load %arg1[%c15] : memref<16xf32, #tpu.memory_space<smem>>
    %92 = vector.broadcast %91 : f32 to vector<8x1024xf32>
    %93 = arith.select %87, %92, %85 : vector<8x1024xi1>, vector<8x1024xf32>
    %c1_i32_15 = arith.constant 1 : i32
    %94 = tpu.dynamic_rotate %90 by %c1_i32_15 dim 0 : vector<8x1024xf32>, i32 -> vector<8x1024xf32>
    %c1_i32_16 = arith.constant 1 : i32
    %95 = tpu.dynamic_rotate %93 by %c1_i32_16 dim 0 : vector<8x1024xf32>, i32 -> vector<8x1024xf32>
    %96 = arith.subf %90, %94 : vector<8x1024xf32>
    %97 = arith.subf %93, %95 : vector<8x1024xf32>
    %98 = arith.mulf %96, %96 : vector<8x1024xf32>
    %99 = arith.mulf %97, %97 : vector<8x1024xf32>
    %100 = arith.addf %98, %99 : vector<8x1024xf32>
    %101 = math.sqrt %100 : vector<8x1024xf32>
    %cst_17 = arith.constant dense<0.000000e+00> : vector<1024xf32>
    %102 = vector.multi_reduction <add>, %101, %cst_17 [0] : vector<8x1024xf32> to vector<1024xf32>
    %103 = vector.shape_cast %102 : vector<1024xf32> to vector<1x1024xf32>
    %c0_18 = arith.constant 0 : index
    %c0_19 = arith.constant 0 : index
    %104 = vector.load %arg5[%c0_18, %c0_19] : memref<1x1024xf32, #tpu.memory_space<vmem>>, vector<1x1024xf32>
    tpu.vector_store %arg5[%c0_18, %c0_19], %103 {strides = array<i32>} : memref<1x1024xf32, #tpu.memory_space<vmem>>, vector<1x1024xf32>,
    return
  }
  func.func @transform_0(%arg0: i32) -> i32 {
    %c0_i32 = arith.constant 0 : i32
    %c0_i32_0 = arith.constant 0 : i32
    return %c0_i32 : i32
  }
  func.func @transform_1(%arg0: i32) -> (i32, i32) {
    %c0_i32 = arith.constant 0 : i32
    %c0_i32_0 = arith.constant 0 : i32
    return %c0_i32, %arg0 : i32, i32
  }
  func.func @transform_2(%arg0: i32) -> (i32, i32) {
    %c0_i32 = arith.constant 0 : i32
    %c0_i32_0 = arith.constant 0 : i32
    return %c0_i32, %arg0 : i32, i32
  }
  func.func @transform_3(%arg0: i32) -> (i32, i32) {
    %c0_i32 = arith.constant 0 : i32
    %c0_i32_0 = arith.constant 0 : i32
    return %c0_i32, %arg0 : i32, i32
  }
  func.func @transform_4(%arg0: i32) -> (i32, i32) {
    %c0_i32 = arith.constant 0 : i32
    %c0_i32_0 = arith.constant 0 : i32
    return %c0_i32, %arg0 : i32, i32
  }
}

</mosaic_0001>

<llo_original>
// kernel: tpu_custom_call.1
$region0: #{tpu_custom_call.1}
  #allocation0 [shape = 'u32[]', space=smem, size = 0x4, offset = 0x4, fixed_abs, tag = 'smem constant byte address 0x4 - core index']
  #allocation1 [shape = 'u32[144,128]{1,0:T(1,128)}', space=vmem, size = 0x12000, scoped, tag = 'internal scratch']
  %s0 = inlined_call_operand.vmem [shape: f32[16], index: 0, kind: input, shape index: {}]
  %s1 = inlined_call_operand.vmem [shape: s32[2,1024], index: 1, kind: input, shape index: {}]
  %s2 = inlined_call_operand.hbm [shape: s32[8,1024], index: 2, kind: input, shape index: {}, may-alias: {2,3}]
  %s3 = inlined_call_operand.hbm [shape: s32[8,1024], index: 3, kind: output, shape index: {0}, may-alias: {2,3}]
  %s4 = inlined_call_operand.hbm [shape: f32[1,1024], index: 4, kind: output, shape index: {1}]
  %5 = xla_tuple %s3, %s4
  %s6 = sld [smem:[#allocation0]]
  $region38: #{tpu_custom_call.1} parent=0
    _
  %s8 = ssub.s32 1, %s6
  %s9 = scalar_select 0, %s8, %s6
  $region1: #{tpu_custom_call.1} parent=0
    #allocation2 [shape = 'u8[512]{0}', space=smem, size = 0x200, scoped, tag = 'input window, operand 0, single buffered']
    #allocation3 [shape = 's32[1]{0}', space=sflag, size = 0x4, scoped, tag = 'scoped memory for tpu_custom_call.1']
    #allocation4 [shape = 's32[1]{0}', space=sflag, size = 0x4, scoped, tag = 'scoped memory for tpu_custom_call.1']
    #allocation5 [shape = 's32[1]{0}', space=sflag, size = 0x4, scoped, tag = 'scoped memory for tpu_custom_call.1']
    #allocation6 [shape = 'u8[32768]{0}', space=vmem, size = 0x8000, scoped, tag = 'input window, operand 2, single buffered']
    #allocation7 [shape = 'u8[32768]{0}', space=vmem, size = 0x8000, scoped, tag = 'output window, operand 0, single buffered']
    #allocation8 [shape = 'u8[4096]{0}', space=vmem, size = 0x1000, scoped, tag = 'output window, operand 1, single buffered']
    #allocation9 [shape = 's32[1]{0}', space=sflag, size = 0x4, scoped, tag = 'scoped memory for tpu_custom_call.1']
    %10 = vsyncpa [#allocation5], 0
    %11 = vsyncpa [#allocation3], 0
    %12 = vsyncpa [#allocation4], 0
    %13 = vsyncpa [#allocation9], 0
    // Predicated region
    $region2: #{tpu_custom_call.1} parent=1 // pred_check
      _
    $region3: #{tpu_custom_call.1} parent=1 // pred_check_branch
      %15 = sbr.rel (0) target = $region5
    $region4: #{tpu_custom_call.1} parent=1 // pred_region
      %s17 = ssub.s32 16, 16
      %18 = vsyncadd [#allocation5], %s17
      %s20 = sshll.u32 %s0, 4
      %s21 = int_to_ptr.vmem [resolvable:$true] %s20
      %23 = dma.vmem_to_smem %s21, 16, [#allocation2], [#allocation5]
    $region5: #{tpu_custom_call.1} parent=1 // pred_fallthru
      _
    // Predicated region
    $region6: #{tpu_custom_call.1} parent=1 // pred_check
      _
    $region7: #{tpu_custom_call.1} parent=1 // pred_check_branch
      %25 = sbr.rel (0) target = $region9
    $region8: #{tpu_custom_call.1} parent=1 // pred_region
      _
    $region9: #{tpu_custom_call.1} parent=1 // pred_fallthru
      _
    // Predicated region
    $region10: #{tpu_custom_call.1} parent=1 // pred_check
      _
    $region11: #{tpu_custom_call.1} parent=1 // pred_check_branch
      %27 = sbr.rel (0) target = $region13
    $region12: #{tpu_custom_call.1} parent=1 // pred_region
      %s29 = ssub.s32 1024, 1024
      %30 = vsyncadd [#allocation3], %s29
      %s32 = sshll.u32 [#allocation6], 4
      %s33 = int_to_ptr.vmem [resolvable:$true] %s32
      %35 = dma.hbm_to_vmem [thread:$0]  %s2, 1024, %s33, [#allocation3]
    $region13: #{tpu_custom_call.1} parent=1 // pred_fallthru
      _
    // Predicated region
    $region14: #{tpu_custom_call.1} parent=1 // pred_check
      _
    $region15: #{tpu_custom_call.1} parent=1 // pred_check_branch
      %37 = sbr.rel (0) target = $region17
    $region16: #{tpu_custom_call.1} parent=1 // pred_region
      %38 = dma.done [#allocation5], 16
    $region17: #{tpu_custom_call.1} parent=1 // pred_fallthru
      _
    // Predicated region
    $region18: #{tpu_custom_call.1} parent=1 // pred_check
      _
    $region19: #{tpu_custom_call.1} parent=1 // pred_check_branch
      %40 = sbr.rel (0) target = $region21
    $region20: #{tpu_custom_call.1} parent=1 // pred_region
      %41 = dma.done [#allocation3], 1024
    $region21: #{tpu_custom_call.1} parent=1 // pred_fallthru
      _
    %42 = sfence
    %v43 = vld [vmem:[#allocation6] sm:$0xff]
    %v44 = vld [vmem:[#allocation6 + $0x8] sm:$0xff]
    %v45 = vld [vmem:[#allocation6 + $0x10] sm:$0xff]
    %v46 = vld [vmem:[#allocation6 + $0x18] sm:$0xff]
    %v47 = vld [vmem:[#allocation6 + $0x20] sm:$0xff]
    %v48 = vld [vmem:[#allocation6 + $0x28] sm:$0xff]
    %v49 = vld [vmem:[#allocation6 + $0x30] sm:$0xff]
    %v50 = vld [vmem:[#allocation6 + $0x38] sm:$0xff]
    %v51 = vld [vmem:[%s1] ss:$2 sm:$0xff]
    %s52 = scalar_lea.vmem %s1, 1
    %v53 = vld [vmem:[%s52] ss:$2 sm:$0xff]
    %v54 = vlaneseq
    %v55 = vshrl.u32 %v54, 7
    %v56 = vlaneseq
    %v57 = vshrl.u32 %v56, 7
    %v58 = vsub.s32 0, %v57
    %v59 = vrot.slane %v51, %v58
    %v60 = vlaneseq
    %v61 = vshrl.u32 %v60, 7
    %v62 = vsub.s32 1, %v61
    %v63 = vrot.slane %v51, %v62
    %v64 = vlaneseq
    %v65 = vshrl.u32 %v64, 7
    %v66 = vsub.s32 2, %v65
    %v67 = vrot.slane %v51, %v66
    %v68 = vlaneseq
    %v69 = vshrl.u32 %v68, 7
    %v70 = vsub.s32 3, %v69
    %v71 = vrot.slane %v51, %v70
    %v72 = vlaneseq
    %v73 = vshrl.u32 %v72, 7
    %v74 = vsub.s32 4, %v73
    %v75 = vrot.slane %v51, %v74
    %v76 = vlaneseq
    %v77 = vshrl.u32 %v76, 7
    %v78 = vsub.s32 5, %v77
    %v79 = vrot.slane %v51, %v78
    %v80 = vlaneseq
    %v81 = vshrl.u32 %v80, 7
    %v82 = vsub.s32 6, %v81
    %v83 = vrot.slane %v51, %v82
    %v84 = vlaneseq
    %v85 = vshrl.u32 %v84, 7
    %v86 = vsub.s32 7, %v85
    %v87 = vrot.slane %v51, %v86
    %vm88 = vcmp.eq.s32.totalorder %v55, %v59
    %vm89 = vcmp.eq.s32.totalorder %v55, %v63
    %vm90 = vcmp.eq.s32.totalorder %v55, %v67
    %vm91 = vcmp.eq.s32.totalorder %v55, %v71
    %vm92 = vcmp.eq.s32.totalorder %v55, %v75
    %vm93 = vcmp.eq.s32.totalorder %v55, %v79
    %vm94 = vcmp.eq.s32.totalorder %v55, %v83
    %vm95 = vcmp.eq.s32.totalorder %v55, %v87
    %v96 = vlaneseq
    %v97 = vshrl.u32 %v96, 7
    %v98 = vsub.s32 0, %v97
    %v99 = vrot.slane %v53, %v98
    %v100 = vlaneseq
    %v101 = vshrl.u32 %v100, 7
    %v102 = vsub.s32 1, %v101
    %v103 = vrot.slane %v53, %v102
    %v104 = vlaneseq
    %v105 = vshrl.u32 %v104, 7
    %v106 = vsub.s32 2, %v105
    %v107 = vrot.slane %v53, %v106
    %v108 = vlaneseq
    %v109 = vshrl.u32 %v108, 7
    %v110 = vsub.s32 3, %v109
    %v111 = vrot.slane %v53, %v110
    %v112 = vlaneseq
    %v113 = vshrl.u32 %v112, 7
    %v114 = vsub.s32 4, %v113
    %v115 = vrot.slane %v53, %v114
    %v116 = vlaneseq
    %v117 = vshrl.u32 %v116, 7
    %v118 = vsub.s32 5, %v117
    %v119 = vrot.slane %v53, %v118
    %v120 = vlaneseq
    %v121 = vshrl.u32 %v120, 7
    %v122 = vsub.s32 6, %v121
    %v123 = vrot.slane %v53, %v122
    %v124 = vlaneseq
    %v125 = vshrl.u32 %v124, 7
    %v126 = vsub.s32 7, %v125
    %v127 = vrot.slane %v53, %v126
    %vm128 = vcmp.eq.s32.totalorder %v55, %v99
    %vm129 = vcmp.eq.s32.totalorder %v55, %v103
    %vm130 = vcmp.eq.s32.totalorder %v55, %v107
    %vm131 = vcmp.eq.s32.totalorder %v55, %v111
    %vm132 = vcmp.eq.s32.totalorder %v55, %v115
    %vm133 = vcmp.eq.s32.totalorder %v55, %v119
    %vm134 = vcmp.eq.s32.totalorder %v55, %v123
    %vm135 = vcmp.eq.s32.totalorder %v55, %v127
    %v136 = vsel %vm88, %v43, 0
    %v137 = vsel %vm89, %v44, 0
    %v138 = vsel %vm90, %v45, 0
    %v139 = vsel %vm91, %v46, 0
    %v140 = vsel %vm92, %v47, 0
    %v141 = vsel %vm93, %v48, 0
    %v142 = vsel %vm94, %v49, 0
    %v143 = vsel %vm95, %v50, 0
    %v144 = vsel %vm128, %v43, 0
    %v145 = vsel %vm129, %v44, 0
    %v146 = vsel %vm130, %v45, 0
    %v147 = vsel %vm131, %v46, 0
    %v148 = vsel %vm132, %v47, 0
    %v149 = vsel %vm133, %v48, 0
    %v150 = vsel %vm134, %v49, 0
    %v151 = vsel %vm135, %v50, 0
    %v152 = vshll.u32 %v144, 3
    %v153 = vshll.u32 %v145, 3
    %v154 = vshll.u32 %v146, 3
    %v155 = vshll.u32 %v147, 3
    %v156 = vshll.u32 %v148, 3
    %v157 = vshll.u32 %v149, 3
    %v158 = vshll.u32 %v150, 3
    %v159 = vshll.u32 %v151, 3
    %v160 = vor.u32 %v136, %v152
    %v161 = vor.u32 %v137, %v153
    %v162 = vor.u32 %v138, %v154
    %v163 = vor.u32 %v139, %v155
    %v164 = vor.u32 %v140, %v156
    %v165 = vor.u32 %v141, %v157
    %v166 = vor.u32 %v142, %v158
    %v167 = vor.u32 %v143, %v159
    %v168 = vrot.slane %v160, 4
    %v169 = vadd.s32 %v160, %v168
    %v170 = vrot.slane %v169, 2
    %v171 = vadd.s32 %v169, %v170
    %v172 = vrot.slane %v171, 1
    %v173 = vadd.s32 %v171, %v172
    %v174 = vrot.slane %v161, 4
    %v175 = vadd.s32 %v161, %v174
    %v176 = vrot.slane %v175, 2
    %v177 = vadd.s32 %v175, %v176
    %v178 = vrot.slane %v177, 1
    %v179 = vadd.s32 %v177, %v178
    %v180 = vrot.slane %v162, 4
    %v181 = vadd.s32 %v162, %v180
    %v182 = vrot.slane %v181, 2
    %v183 = vadd.s32 %v181, %v182
    %v184 = vrot.slane %v183, 1
    %v185 = vadd.s32 %v183, %v184
    %v186 = vrot.slane %v163, 4
    %v187 = vadd.s32 %v163, %v186
    %v188 = vrot.slane %v187, 2
    %v189 = vadd.s32 %v187, %v188
    %v190 = vrot.slane %v189, 1
    %v191 = vadd.s32 %v189, %v190
    %v192 = vrot.slane %v164, 4
    %v193 = vadd.s32 %v164, %v192
    %v194 = vrot.slane %v193, 2
    %v195 = vadd.s32 %v193, %v194
    %v196 = vrot.slane %v195, 1
    %v197 = vadd.s32 %v195, %v196
    %v198 = vrot.slane %v165, 4
    %v199 = vadd.s32 %v165, %v198
    %v200 = vrot.slane %v199, 2
    %v201 = vadd.s32 %v199, %v200
    %v202 = vrot.slane %v201, 1
    %v203 = vadd.s32 %v201, %v202
    %v204 = vrot.slane %v166, 4
    %v205 = vadd.s32 %v166, %v204
    %v206 = vrot.slane %v205, 2
    %v207 = vadd.s32 %v205, %v206
    %v208 = vrot.slane %v207, 1
    %v209 = vadd.s32 %v207, %v208
    %v210 = vrot.slane %v167, 4
    %v211 = vadd.s32 %v167, %v210
    %v212 = vrot.slane %v211, 2
    %v213 = vadd.s32 %v211, %v212
    %v214 = vrot.slane %v213, 1
    %v215 = vadd.s32 %v213, %v214
    %v216 = vand.u32 %v173, 7
    %v217 = vand.u32 %v179, 7
    %v218 = vand.u32 %v185, 7
    %v219 = vand.u32 %v191, 7
    %v220 = vand.u32 %v197, 7
    %v221 = vand.u32 %v203, 7
    %v222 = vand.u32 %v209, 7
    %v223 = vand.u32 %v215, 7
    %v224 = vshra.s32 %v173, 3
    %v225 = vshra.s32 %v179, 3
    %v226 = vshra.s32 %v185, 3
    %v227 = vshra.s32 %v191, 3
    %v228 = vshra.s32 %v197, 3
    %v229 = vshra.s32 %v203, 3
    %v230 = vshra.s32 %v209, 3
    %v231 = vshra.s32 %v215, 3
    %v232 = vsel %vm128, %v216, %v43
    %v233 = vsel %vm129, %v217, %v44
    %v234 = vsel %vm130, %v218, %v45
    %v235 = vsel %vm131, %v219, %v46
    %v236 = vsel %vm132, %v220, %v47
    %v237 = vsel %vm133, %v221, %v48
    %v238 = vsel %vm134, %v222, %v49
    %v239 = vsel %vm135, %v223, %v50
    %v240 = vsel %vm88, %v224, %v232
    %v241 = vsel %vm89, %v225, %v233
    %v242 = vsel %vm90, %v226, %v234
    %v243 = vsel %vm91, %v227, %v235
    %v244 = vsel %vm92, %v228, %v236
    %v245 = vsel %vm93, %v229, %v237
    %v246 = vsel %vm94, %v230, %v238
    %v247 = vsel %vm95, %v231, %v239
    %248 = vst [vmem:[#allocation7] sm:$0xff] %v240
    %249 = vst [vmem:[#allocation7 + $0x8] sm:$0xff] %v241
    %250 = vst [vmem:[#allocation7 + $0x10] sm:$0xff] %v242
    %251 = vst [vmem:[#allocation7 + $0x18] sm:$0xff] %v243
    %252 = vst [vmem:[#allocation7 + $0x20] sm:$0xff] %v244
    %253 = vst [vmem:[#allocation7 + $0x28] sm:$0xff] %v245
    %254 = vst [vmem:[#allocation7 + $0x30] sm:$0xff] %v246
    %255 = vst [vmem:[#allocation7 + $0x38] sm:$0xff] %v247
    %vm256 = vcmp.eq.s32.totalorder %v240, 0
    %vm257 = vcmp.eq.s32.totalorder %v241, 0
    %vm258 = vcmp.eq.s32.totalorder %v242, 0
    %vm259 = vcmp.eq.s32.totalorder %v243, 0
    %vm260 = vcmp.eq.s32.totalorder %v244, 0
    %vm261 = vcmp.eq.s32.totalorder %v245, 0
    %vm262 = vcmp.eq.s32.totalorder %v246, 0
    %vm263 = vcmp.eq.s32.totalorder %v247, 0
    %s264 = sld [smem:[#allocation2]]
    %v265 = vstv %s264
    %v266 = vsel %vm256, %v265, 0.0
    %v267 = vsel %vm257, %v265, 0.0
    %v268 = vsel %vm258, %v265, 0.0
    %v269 = vsel %vm259, %v265, 0.0
    %v270 = vsel %vm260, %v265, 0.0
    %v271 = vsel %vm261, %v265, 0.0
    %v272 = vsel %vm262, %v265, 0.0
    %v273 = vsel %vm263, %v265, 0.0
    %s274 = sld [smem:[#allocation2 + $0x1]]
    %v275 = vstv %s274
    %v276 = vsel %vm256, %v275, 0.0
    %v277 = vsel %vm257, %v275, 0.0
    %v278 = vsel %vm258, %v275, 0.0
    %v279 = vsel %vm259, %v275, 0.0
    %v280 = vsel %vm260, %v275, 0.0
    %v281 = vsel %vm261, %v275, 0.0
    %v282 = vsel %vm262, %v275, 0.0
    %v283 = vsel %vm263, %v275, 0.0
    %vm284 = vcmp.eq.s32.totalorder %v240, 1
    %vm285 = vcmp.eq.s32.totalorder %v241, 1
    %vm286 = vcmp.eq.s32.totalorder %v242, 1
    %vm287 = vcmp.eq.s32.totalorder %v243, 1
    %vm288 = vcmp.eq.s32.totalorder %v244, 1
    %vm289 = vcmp.eq.s32.totalorder %v245, 1
    %vm290 = vcmp.eq.s32.totalorder %v246, 1
    %vm291 = vcmp.eq.s32.totalorder %v247, 1
    %s292 = sld [smem:[#allocation2 + $0x2]]
    %v293 = vstv %s292
    %v294 = vsel %vm284, %v293, %v266
    %v295 = vsel %vm285, %v293, %v267
    %v296 = vsel %vm286, %v293, %v268
    %v297 = vsel %vm287, %v293, %v269
    %v298 = vsel %vm288, %v293, %v270
    %v299 = vsel %vm289, %v293, %v271
    %v300 = vsel %vm290, %v293, %v272
    %v301 = vsel %vm291, %v293, %v273
    %s302 = sld [smem:[#allocation2 + $0x3]]
    %v303 = vstv %s302
    %v304 = vsel %vm284, %v303, %v276
    %v305 = vsel %vm285, %v303, %v277
    %v306 = vsel %vm286, %v303, %v278
    %v307 = vsel %vm287, %v303, %v279
    %v308 = vsel %vm288, %v303, %v280
    %v309 = vsel %vm289, %v303, %v281
    %v310 = vsel %vm290, %v303, %v282
    %v311 = vsel %vm291, %v303, %v283
    %vm312 = vcmp.eq.s32.totalorder %v240, 2
    %vm313 = vcmp.eq.s32.totalorder %v241, 2
    %vm314 = vcmp.eq.s32.totalorder %v242, 2
    %vm315 = vcmp.eq.s32.totalorder %v243, 2
    %vm316 = vcmp.eq.s32.totalorder %v244, 2
    %vm317 = vcmp.eq.s32.totalorder %v245, 2
    %vm318 = vcmp.eq.s32.totalorder %v246, 2
    %vm319 = vcmp.eq.s32.totalorder %v247, 2
    %s320 = sld [smem:[#allocation2 + $0x4]]
    %v321 = vstv %s320
    %v322 = vsel %vm312, %v321, %v294
    %v323 = vsel %vm313, %v321, %v295
    %v324 = vsel %vm314, %v321, %v296
    %v325 = vsel %vm315, %v321, %v297
    %v326 = vsel %vm316, %v321, %v298
    %v327 = vsel %vm317, %v321, %v299
    %v328 = vsel %vm318, %v321, %v300
    %v329 = vsel %vm319, %v321, %v301
    %s330 = sld [smem:[#allocation2 + $0x5]]
    %v331 = vstv %s330
    %v332 = vsel %vm312, %v331, %v304
    %v333 = vsel %vm313, %v331, %v305
    %v334 = vsel %vm314, %v331, %v306
    %v335 = vsel %vm315, %v331, %v307
    %v336 = vsel %vm316, %v331, %v308
    %v337 = vsel %vm317, %v331, %v309
    %v338 = vsel %vm318, %v331, %v310
    %v339 = vsel %vm319, %v331, %v311
    %vm340 = vcmp.eq.s32.totalorder %v240, 3
    %vm341 = vcmp.eq.s32.totalorder %v241, 3
    %vm342 = vcmp.eq.s32.totalorder %v242, 3
    %vm343 = vcmp.eq.s32.totalorder %v243, 3
    %vm344 = vcmp.eq.s32.totalorder %v244, 3
    %vm345 = vcmp.eq.s32.totalorder %v245, 3
    %vm346 = vcmp.eq.s32.totalorder %v246, 3
    %vm347 = vcmp.eq.s32.totalorder %v247, 3
    %s348 = sld [smem:[#allocation2 + $0x6]]
    %v349 = vstv %s348
    %v350 = vsel %vm340, %v349, %v322
    %v351 = vsel %vm341, %v349, %v323
    %v352 = vsel %vm342, %v349, %v324
    %v353 = vsel %vm343, %v349, %v325
    %v354 = vsel %vm344, %v349, %v326
    %v355 = vsel %vm345, %v349, %v327
    %v356 = vsel %vm346, %v349, %v328
    %v357 = vsel %vm347, %v349, %v329
    %s358 = sld [smem:[#allocation2 + $0x7]]
    %v359 = vstv %s358
    %v360 = vsel %vm340, %v359, %v332
    %v361 = vsel %vm341, %v359, %v333
    %v362 = vsel %vm342, %v359, %v334
    %v363 = vsel %vm343, %v359, %v335
    %v364 = vsel %vm344, %v359, %v336
    %v365 = vsel %vm345, %v359, %v337
    %v366 = vsel %vm346, %v359, %v338
    %v367 = vsel %vm347, %v359, %v339
    %vm368 = vcmp.eq.s32.totalorder %v240, 4
    %vm369 = vcmp.eq.s32.totalorder %v241, 4
    %vm370 = vcmp.eq.s32.totalorder %v242, 4
    %vm371 = vcmp.eq.s32.totalorder %v243, 4
    %vm372 = vcmp.eq.s32.totalorder %v244, 4
    %vm373 = vcmp.eq.s32.totalorder %v245, 4
    %vm374 = vcmp.eq.s32.totalorder %v246, 4
    %vm375 = vcmp.eq.s32.totalorder %v247, 4
    %s376 = sld [smem:[#allocation2 + $0x8]]
    %v377 = vstv %s376
    %v378 = vsel %vm368, %v377, %v350
    %v379 = vsel %vm369, %v377, %v351
    %v380 = vsel %vm370, %v377, %v352
    %v381 = vsel %vm371, %v377, %v353
    %v382 = vsel %vm372, %v377, %v354
    %v383 = vsel %vm373, %v377, %v355
    %v384 = vsel %vm374, %v377, %v356
    %v385 = vsel %vm375, %v377, %v357
    %s386 = sld [smem:[#allocation2 + $0x9]]
    %v387 = vstv %s386
    %v388 = vsel %vm368, %v387, %v360
    %v389 = vsel %vm369, %v387, %v361
    %v390 = vsel %vm370, %v387, %v362
    %v391 = vsel %vm371, %v387, %v363
    %v392 = vsel %vm372, %v387, %v364
    %v393 = vsel %vm373, %v387, %v365
    %v394 = vsel %vm374, %v387, %v366
    %v395 = vsel %vm375, %v387, %v367
    %vm396 = vcmp.eq.s32.totalorder %v240, 5
    %vm397 = vcmp.eq.s32.totalorder %v241, 5
    %vm398 = vcmp.eq.s32.totalorder %v242, 5
    %vm399 = vcmp.eq.s32.totalorder %v243, 5
    %vm400 = vcmp.eq.s32.totalorder %v244, 5
    %vm401 = vcmp.eq.s32.totalorder %v245, 5
    %vm402 = vcmp.eq.s32.totalorder %v246, 5
    %vm403 = vcmp.eq.s32.totalorder %v247, 5
    %s404 = sld [smem:[#allocation2 + $0xa]]
    %v405 = vstv %s404
    %v406 = vsel %vm396, %v405, %v378
    %v407 = vsel %vm397, %v405, %v379
    %v408 = vsel %vm398, %v405, %v380
    %v409 = vsel %vm399, %v405, %v381
    %v410 = vsel %vm400, %v405, %v382
    %v411 = vsel %vm401, %v405, %v383
    %v412 = vsel %vm402, %v405, %v384
    %v413 = vsel %vm403, %v405, %v385
    %s414 = sld [smem:[#allocation2 + $0xb]]
    %v415 = vstv %s414
    %v416 = vsel %vm396, %v415, %v388
    %v417 = vsel %vm397, %v415, %v389
    %v418 = vsel %vm398, %v415, %v390
    %v419 = vsel %vm399, %v415, %v391
    %v420 = vsel %vm400, %v415, %v392
    %v421 = vsel %vm401, %v415, %v393
    %v422 = vsel %vm402, %v415, %v394
    %v423 = vsel %vm403, %v415, %v395
    %vm424 = vcmp.eq.s32.totalorder %v240, 6
    %vm425 = vcmp.eq.s32.totalorder %v241, 6
    %vm426 = vcmp.eq.s32.totalorder %v242, 6
    %vm427 = vcmp.eq.s32.totalorder %v243, 6
    %vm428 = vcmp.eq.s32.totalorder %v244, 6
    %vm429 = vcmp.eq.s32.totalorder %v245, 6
    %vm430 = vcmp.eq.s32.totalorder %v246, 6
    %vm431 = vcmp.eq.s32.totalorder %v247, 6
    %s432 = sld [smem:[#allocation2 + $0xc]]
    %v433 = vstv %s432
    %v434 = vsel %vm424, %v433, %v406
    %v435 = vsel %vm425, %v433, %v407
    %v436 = vsel %vm426, %v433, %v408
    %v437 = vsel %vm427, %v433, %v409
    %v438 = vsel %vm428, %v433, %v410
    %v439 = vsel %vm429, %v433, %v411
    %v440 = vsel %vm430, %v433, %v412
    %v441 = vsel %vm431, %v433, %v413
    %s442 = sld [smem:[#allocation2 + $0xd]]
    %v443 = vstv %s442
    %v444 = vsel %vm424, %v443, %v416
    %v445 = vsel %vm425, %v443, %v417
    %v446 = vsel %vm426, %v443, %v418
    %v447 = vsel %vm427, %v443, %v419
    %v448 = vsel %vm428, %v443, %v420
    %v449 = vsel %vm429, %v443, %v421
    %v450 = vsel %vm430, %v443, %v422
    %v451 = vsel %vm431, %v443, %v423
    %vm452 = vcmp.eq.s32.totalorder %v240, 7
    %vm453 = vcmp.eq.s32.totalorder %v241, 7
    %vm454 = vcmp.eq.s32.totalorder %v242, 7
    %vm455 = vcmp.eq.s32.totalorder %v243, 7
    %vm456 = vcmp.eq.s32.totalorder %v244, 7
    %vm457 = vcmp.eq.s32.totalorder %v245, 7
    %vm458 = vcmp.eq.s32.totalorder %v246, 7
    %vm459 = vcmp.eq.s32.totalorder %v247, 7
    %s460 = sld [smem:[#allocation2 + $0xe]]
    %v461 = vstv %s460
    %v462 = vsel %vm452, %v461, %v434
    %v463 = vsel %vm453, %v461, %v435
    %v464 = vsel %vm454, %v461, %v436
    %v465 = vsel %vm455, %v461, %v437
    %v466 = vsel %vm456, %v461, %v438
    %v467 = vsel %vm457, %v461, %v439
    %v468 = vsel %vm458, %v461, %v440
    %v469 = vsel %vm459, %v461, %v441
    %s470 = sld [smem:[#allocation2 + $0xf]]
    %v471 = vstv %s470
    %v472 = vsel %vm452, %v471, %v444
    %v473 = vsel %vm453, %v471, %v445
    %v474 = vsel %vm454, %v471, %v446
    %v475 = vsel %vm455, %v471, %v447
    %v476 = vsel %vm456, %v471, %v448
    %v477 = vsel %vm457, %v471, %v449
    %v478 = vsel %vm458, %v471, %v450
    %v479 = vsel %vm459, %v471, %v451
    %v480 = vrot.slane %v462, 7
    %v481 = vrot.slane %v463, 7
    %v482 = vrot.slane %v464, 7
    %v483 = vrot.slane %v465, 7
    %v484 = vrot.slane %v466, 7
    %v485 = vrot.slane %v467, 7
    %v486 = vrot.slane %v468, 7
    %v487 = vrot.slane %v469, 7
    %v488 = vrot.slane %v472, 7
    %v489 = vrot.slane %v473, 7
    %v490 = vrot.slane %v474, 7
    %v491 = vrot.slane %v475, 7
    %v492 = vrot.slane %v476, 7
    %v493 = vrot.slane %v477, 7
    %v494 = vrot.slane %v478, 7
    %v495 = vrot.slane %v479, 7
    %v496 = vsub.f32 %v462, %v480
    %v497 = vsub.f32 %v463, %v481
    %v498 = vsub.f32 %v464, %v482
    %v499 = vsub.f32 %v465, %v483
    %v500 = vsub.f32 %v466, %v484
    %v501 = vsub.f32 %v467, %v485
    %v502 = vsub.f32 %v468, %v486
    %v503 = vsub.f32 %v469, %v487
    %v504 = vsub.f32 %v472, %v488
    %v505 = vsub.f32 %v473, %v489
    %v506 = vsub.f32 %v474, %v490
    %v507 = vsub.f32 %v475, %v491
    %v508 = vsub.f32 %v476, %v492
    %v509 = vsub.f32 %v477, %v493
    %v510 = vsub.f32 %v478, %v494
    %v511 = vsub.f32 %v479, %v495
    %v512 = vmul.f32 %v496, %v496
    %v513 = vmul.f32 %v497, %v497
    %v514 = vmul.f32 %v498, %v498
    %v515 = vmul.f32 %v499, %v499
    %v516 = vmul.f32 %v500, %v500
    %v517 = vmul.f32 %v501, %v501
    %v518 = vmul.f32 %v502, %v502
    %v519 = vmul.f32 %v503, %v503
    %v520 = vmul.f32 %v504, %v504
    %v521 = vmul.f32 %v505, %v505
    %v522 = vmul.f32 %v506, %v506
    %v523 = vmul.f32 %v507, %v507
    %v524 = vmul.f32 %v508, %v508
    %v525 = vmul.f32 %v509, %v509
    %v526 = vmul.f32 %v510, %v510
    %v527 = vmul.f32 %v511, %v511
    %v528 = vadd.f32 %v512, %v520
    %v529 = vadd.f32 %v513, %v521
    %v530 = vadd.f32 %v514, %v522
    %v531 = vadd.f32 %v515, %v523
    %v532 = vadd.f32 %v516, %v524
    %v533 = vadd.f32 %v517, %v525
    %v534 = vadd.f32 %v518, %v526
    %v535 = vadd.f32 %v519, %v527
    %v536 = vrsqrt.pop %v528
    %v537 = vmul.f32 %v528, %v536
    %vm538 = vcmp.eq.f32.partialorder %v528, inf
    %v539 = vsel %vm538, %v528, %v537
    %vm540 = vcmp.eq.f32.partialorder %v528, 0.0
    %v541 = vand.u32 %v528, 2147483648
    %v542 = vsel %vm540, %v541, %v539
    %v543 = vrsqrt.pop %v529
    %v544 = vmul.f32 %v529, %v543
    %vm545 = vcmp.eq.f32.partialorder %v529, inf
    %v546 = vsel %vm545, %v529, %v544
    %vm547 = vcmp.eq.f32.partialorder %v529, 0.0
    %v548 = vand.u32 %v529, 2147483648
    %v549 = vsel %vm547, %v548, %v546
    %v550 = vrsqrt.pop %v530
    %v551 = vmul.f32 %v530, %v550
    %vm552 = vcmp.eq.f32.partialorder %v530, inf
    %v553 = vsel %vm552, %v530, %v551
    %vm554 = vcmp.eq.f32.partialorder %v530, 0.0
    %v555 = vand.u32 %v530, 2147483648
    %v556 = vsel %vm554, %v555, %v553
    %v557 = vrsqrt.pop %v531
    %v558 = vmul.f32 %v531, %v557
    %vm559 = vcmp.eq.f32.partialorder %v531, inf
    %v560 = vsel %vm559, %v531, %v558
    %vm561 = vcmp.eq.f32.partialorder %v531, 0.0
    %v562 = vand.u32 %v531, 2147483648
    %v563 = vsel %vm561, %v562, %v560
    %v564 = vrsqrt.pop %v532
    %v565 = vmul.f32 %v532, %v564
    %vm566 = vcmp.eq.f32.partialorder %v532, inf
    %v567 = vsel %vm566, %v532, %v565
    %vm568 = vcmp.eq.f32.partialorder %v532, 0.0
    %v569 = vand.u32 %v532, 2147483648
    %v570 = vsel %vm568, %v569, %v567
    %v571 = vrsqrt.pop %v533
    %v572 = vmul.f32 %v533, %v571
    %vm573 = vcmp.eq.f32.partialorder %v533, inf
    %v574 = vsel %vm573, %v533, %v572
    %vm575 = vcmp.eq.f32.partialorder %v533, 0.0
    %v576 = vand.u32 %v533, 2147483648
    %v577 = vsel %vm575, %v576, %v574
    %v578 = vrsqrt.pop %v534
    %v579 = vmul.f32 %v534, %v578
    %vm580 = vcmp.eq.f32.partialorder %v534, inf
    %v581 = vsel %vm580, %v534, %v579
    %vm582 = vcmp.eq.f32.partialorder %v534, 0.0
    %v583 = vand.u32 %v534, 2147483648
    %v584 = vsel %vm582, %v583, %v581
    %v585 = vrsqrt.pop %v535
    %v586 = vmul.f32 %v535, %v585
    %vm587 = vcmp.eq.f32.partialorder %v535, inf
    %v588 = vsel %vm587, %v535, %v586
    %vm589 = vcmp.eq.f32.partialorder %v535, 0.0
    %v590 = vand.u32 %v535, 2147483648
    %v591 = vsel %vm589, %v590, %v588
    %v592 = vrot.slane %v542, 4
    %v593 = vadd.f32 %v542, %v592
    %v594 = vrot.slane %v593, 2
    %v595 = vadd.f32 %v593, %v594
    %v596 = vrot.slane %v595, 1
    %v597 = vadd.f32 %v595, %v596
    %v598 = vrot.slane %v549, 4
    %v599 = vadd.f32 %v549, %v598
    %v600 = vrot.slane %v599, 2
    %v601 = vadd.f32 %v599, %v600
    %v602 = vrot.slane %v601, 1
    %v603 = vadd.f32 %v601, %v602
    %v604 = vrot.slane %v556, 4
    %v605 = vadd.f32 %v556, %v604
    %v606 = vrot.slane %v605, 2
    %v607 = vadd.f32 %v605, %v606
    %v608 = vrot.slane %v607, 1
    %v609 = vadd.f32 %v607, %v608
    %v610 = vrot.slane %v563, 4
    %v611 = vadd.f32 %v563, %v610
    %v612 = vrot.slane %v611, 2
    %v613 = vadd.f32 %v611, %v612
    %v614 = vrot.slane %v613, 1
    %v615 = vadd.f32 %v613, %v614
    %v616 = vrot.slane %v570, 4
    %v617 = vadd.f32 %v570, %v616
    %v618 = vrot.slane %v617, 2
    %v619 = vadd.f32 %v617, %v618
    %v620 = vrot.slane %v619, 1
    %v621 = vadd.f32 %v619, %v620
    %v622 = vrot.slane %v577, 4
    %v623 = vadd.f32 %v577, %v622
    %v624 = vrot.slane %v623, 2
    %v625 = vadd.f32 %v623, %v624
    %v626 = vrot.slane %v625, 1
    %v627 = vadd.f32 %v625, %v626
    %v628 = vrot.slane %v584, 4
    %v629 = vadd.f32 %v584, %v628
    %v630 = vrot.slane %v629, 2
    %v631 = vadd.f32 %v629, %v630
    %v632 = vrot.slane %v631, 1
    %v633 = vadd.f32 %v631, %v632
    %v634 = vrot.slane %v591, 4
    %v635 = vadd.f32 %v591, %v634
    %v636 = vrot.slane %v635, 2
    %v637 = vadd.f32 %v635, %v636
    %v638 = vrot.slane %v637, 1
    %v639 = vadd.f32 %v637, %v638
    %v648 = vcombine.low %v597, %v603
    %v649 = vcombine.low %v609, %v615
    %v650 = vcombine.low %v621, %v627
    %v651 = vcombine.low %v633, %v639
    %v653 = vunpack.c.l.s4 1966171168
    %v654 = vunpack.c.0.s8 %v653
    %v655 = vlaneseq
    %v656 = vshrl.u32 %v655, 7
    %v657 = vsub.s32 %v654, %v656
    %v658 = vrot.slane %v648, %v657
    %v660 = vunpack.c.l.s4 1966171168
    %v661 = vunpack.c.0.s8 %v660
    %v662 = vlaneseq
    %v663 = vshrl.u32 %v662, 7
    %v664 = vsub.s32 %v661, %v663
    %v665 = vrot.slane %v649, %v664
    %v667 = vunpack.c.l.s4 1966171168
    %v668 = vunpack.c.0.s8 %v667
    %v669 = vlaneseq
    %v670 = vshrl.u32 %v669, 7
    %v671 = vsub.s32 %v668, %v670
    %v672 = vrot.slane %v650, %v671
    %v674 = vunpack.c.l.s4 1966171168
    %v675 = vunpack.c.0.s8 %v674
    %v676 = vlaneseq
    %v677 = vshrl.u32 %v676, 7
    %v678 = vsub.s32 %v675, %v677
    %v679 = vrot.slane %v651, %v678
    %v680 = vcombine.low %v658, %v665
    %v681 = vcombine.low %v672, %v679
    %v683 = vunpack.c.l.s4 1966171168
    %v684 = vunpack.c.0.s8 %v683
    %v685 = vlaneseq
    %v686 = vshrl.u32 %v685, 7
    %v687 = vsub.s32 %v684, %v686
    %v688 = vrot.slane %v680, %v687
    %v690 = vunpack.c.l.s4 1966171168
    %v691 = vunpack.c.0.s8 %v690
    %v692 = vlaneseq
    %v693 = vshrl.u32 %v692, 7
    %v694 = vsub.s32 %v691, %v693
    %v695 = vrot.slane %v681, %v694
    %v696 = vcombine.low %v688, %v695
    %698 = vst [vmem:[#allocation8] sm:$0xff] %v696
    // Predicated region
    $region22: #{tpu_custom_call.1} parent=1 // pred_check
      _
    $region23: #{tpu_custom_call.1} parent=1 // pred_check_branch
      %700 = sbr.rel (0) target = $region25
    $region24: #{tpu_custom_call.1} parent=1 // pred_region
      %s702 = ssub.s32 1024, 1024
      %703 = vsyncadd [#allocation4], %s702
      %s705 = sshll.u32 [#allocation7], 4
      %s706 = int_to_ptr.vmem [resolvable:$true] %s705
      %708 = dma.vmem_to_hbm [thread:$0]  %s706, 1024, %s3, [#allocation4]
    $region25: #{tpu_custom_call.1} parent=1 // pred_fallthru
      _
    // Predicated region
    $region26: #{tpu_custom_call.1} parent=1 // pred_check
      _
    $region27: #{tpu_custom_call.1} parent=1 // pred_check_branch
      %710 = sbr.rel (0) target = $region29
    $region28: #{tpu_custom_call.1} parent=1 // pred_region
      %s712 = ssub.s32 128, 128
      %713 = vsyncadd [#allocation9], %s712
      %s715 = sshll.u32 [#allocation8], 4
      %s716 = int_to_ptr.vmem [resolvable:$true] %s715
      %718 = dma.vmem_to_hbm [thread:$0]  %s716, 128, %s4, [#allocation9]
    $region29: #{tpu_custom_call.1} parent=1 // pred_fallthru
      _
    // Predicated region
    $region30: #{tpu_custom_call.1} parent=1 // pred_check
      _
    $region31: #{tpu_custom_call.1} parent=1 // pred_check_branch
      %720 = sbr.rel (0) target = $region33
    $region32: #{tpu_custom_call.1} parent=1 // pred_region
      %721 = dma.done [#allocation4], 1024
    $region33: #{tpu_custom_call.1} parent=1 // pred_fallthru
      _
    // Predicated region
    $region34: #{tpu_custom_call.1} parent=1 // pred_check
      _
    $region35: #{tpu_custom_call.1} parent=1 // pred_check_branch
      %723 = sbr.rel (0) target = $region37
    $region36: #{tpu_custom_call.1} parent=1 // pred_region
      %724 = dma.done [#allocation9], 128
    $region37: #{tpu_custom_call.1} parent=1 // pred_fallthru
      _
    %725 = vsyncpa [#allocation3], 1
    %726 = vsyncpa [#allocation4], 1
    %727 = vsyncpa [#allocation9], 1
    %728 = vsyncpa [#allocation5], 1

</llo_original>
